<compile_context>
chip_gen: v7x
topology: tpu7x:2x2x1
jax: 0.10.0
libtpu: 0.0.40
codegen_flags: <defaults>
</compile_context>

<pallas_src>
import functools

import jax
import jax.numpy as jnp
from jax.experimental import pallas as pl
from jax.experimental.pallas import tpu as pltpu


def _softarg_kernel(x_ref, out_ref, *, size_v, max_u, max_v, negate):
    # x_ref   : (C, TN) logits tile (C = sizeU*sizeV on sublanes, TN lane-dense)
    # out_ref : (2, TN) -> row 0 = flow_u, row 1 = flow_v
    C = x_ref.shape[0]

    x = x_ref[...].astype(jnp.float32)
    if negate:                                # static: softmin(x) == softmax(-x)
        x = -x

    m = jnp.max(x, axis=0, keepdims=True)     # (1, TN)
    e = jnp.exp(x - m)                        # (C, TN) unnormalised softmax

    # Reduction-weight matrix W (8, C), built per step from iotas (~1 vreg of
    # VPU work, negligible):
    #   row 0: ones                      -> softmax denominator
    #   row 1: du[c] = c // sizeV - max_u
    #   row 2: dv[c] = c %  sizeV - max_v
    #   rows 3..7: zeros (sublane padding so the MXU LHS is a clean 8-row tile)
    # u is derived via floor((c + 0.5) / sizeV): the +0.5 keeps the true value
    # at least 0.5/sizeV away from any integer, so f32 rounding of the
    # reciprocal/multiply can never flip the floor (robust for any sizeV).
    ci = jax.lax.broadcasted_iota(jnp.int32, (8, C), 1).astype(jnp.float32)
    row = jax.lax.broadcasted_iota(jnp.int32, (8, C), 0)
    u = jnp.floor((ci + 0.5) * (1.0 / size_v))
    du = u - float(max_u)
    dv = ci - u * float(size_v) - float(max_v)
    w = jnp.where(row == 0, 1.0,
        jnp.where(row == 1, du,
        jnp.where(row == 2, dv, 0.0)))

    # One tiny MXU matmul replaces the three per-element weighted VPU
    # reductions and their (C,1)->(C,TN) broadcasts; f32 (multi-pass) to keep
    # 1e-5 parity with the reference.  FLOPs are negligible (3*C*TN).
    r = jnp.dot(w, e, preferred_element_type=jnp.float32)   # (8, TN)

    # One exact reciprocal per pixel (1/49th of the element rate).
    inv = pl.reciprocal(r[0:1, :], approx=False)             # (1, TN)

    # Single lane-dense store of both flow rows.
    out_ref[...] = (r[1:3, :] * inv).astype(out_ref.dtype)


def _pick_lane_tile(hw, batch, max_tile):
    """Largest lane tile <= max_tile, shrunk only as needed so there are
    enough parallel grid steps to feed both v7x TensorCores."""
    hw_pad = pl.cdiv(hw, 128) * 128
    tn = min(max_tile, hw_pad)

    def n_steps(t):
        return batch * pl.cdiv(hw, t)

    # Prefer >= 4 parallel steps while keeping the tile >= 1024 lanes, and
    # always >= 2 steps if the problem size allows it (so a small single-batch
    # problem doesn't collapse onto one TensorCore).
    while tn > 1024 and n_steps(tn) < 4:
        tn = pl.cdiv(tn // 2, 128) * 128
    while tn > 128 and n_steps(tn) < 2:
        tn = pl.cdiv(tn // 2, 128) * 128
    return tn


def soft_arg2d_flow_regression(x, max_u=3, max_v=3, operation="argmax", tile_n=8192):
    """x: (B, 1, sizeU, sizeV, H, W) float -> (B, 2, H, W) float32."""
    operation = operation.lower()
    assert operation in ("argmax", "argmin")
    assert tile_n >= 128 and tile_n % 128 == 0
    size_u = 2 * max_u + 1
    size_v = 2 * max_v + 1

    x = jnp.squeeze(x, axis=1)                  # (B, sizeU, sizeV, H, W)
    B, su, sv, H, W = x.shape
    assert su == size_u and sv == size_v
    C = size_u * size_v
    HW = H * W

    # Free (contiguous) reshape -- no transpose, no extra HBM pass, no padding.
    x = x.reshape(B, C, HW)

    # Ragged HW is handled by Pallas partial blocks (grid = cdiv, masked tail
    # store); padded lanes only ever produce garbage in columns that are never
    # written back, and each lane column's softmax is independent.
    tn = _pick_lane_tile(HW, B, tile_n)
    grid = (B, pl.cdiv(HW, tn))

    kernel = functools.partial(
        _softarg_kernel,
        size_v=size_v, max_u=max_u, max_v=max_v,
        negate=(operation == "argmin"),
    )

    out = pl.pallas_call(
        kernel,
        out_shape=jax.ShapeDtypeStruct((B, 2, HW), jnp.float32),
        grid_spec=pltpu.PrefetchScalarGridSpec(
            num_scalar_prefetch=0,
            grid=grid,
            in_specs=[
                pl.BlockSpec((None, C, tn), lambda b, n: (b, 0, n)),
            ],
            out_specs=pl.BlockSpec((None, 2, tn), lambda b, n: (b, 0, n)),
        ),
        compiler_params=pltpu.CompilerParams(
            dimension_semantics=("parallel", "parallel"),
        ),
    )(x)

    return out.reshape(B, 2, H, W)


def _reference(x, max_u=3, max_v=3, operation="argmax"):
    size_u = 2 * max_u + 1
    size_v = 2 * max_v + 1
    x = jnp.squeeze(x, axis=1)
    B, _, _, H, W = x.shape
    C = size_u * size_v
    x = x.reshape(B, C, H, W).astype(jnp.float32)
    if operation == "argmin":
        x = -x
    p = jax.nn.softmax(x, axis=1)
    disp_u = jnp.repeat(jnp.arange(-max_u, max_u + 1, dtype=jnp.float32), size_v)
    disp_v = jnp.tile(jnp.arange(-max_v, max_v + 1, dtype=jnp.float32), size_u)
    flow_u = jnp.sum(p * disp_u[None, :, None, None], axis=1)
    flow_v = jnp.sum(p * disp_v[None, :, None, None], axis=1)
    return jnp.stack([flow_u, flow_v], axis=1)


if __name__ == "__main__":
    max_u, max_v = 3, 3
    size_u, size_v = 2 * max_u + 1, 2 * max_v + 1
    key = jax.random.PRNGKey(0)

    # Case 1: H*W a multiple of 128; exercise both argmax and argmin.
    B, H, W = 2, 16, 16
    x = jax.random.normal(key, (B, 1, size_u, size_v, H, W), dtype=jnp.float32)
    for op in ("argmax", "argmin"):
        flow = soft_arg2d_flow_regression(x, max_u=max_u, max_v=max_v, operation=op)
        flow = jax.block_until_ready(flow)
        ref = _reference(x, max_u=max_u, max_v=max_v, operation=op)
        assert flow.shape == (B, 2, H, W)
        assert jnp.allclose(flow, ref, atol=1e-5, rtol=1e-5), f"mismatch vs reference ({op})"

    # Case 2: ragged H*W (exercises the partial-last-block path, no host pad).
    B2, H2, W2 = 2, 15, 15
    x2 = jax.random.normal(jax.random.PRNGKey(0),
                           (B2, 1, size_u, size_v, H2, W2), dtype=jnp.float32)
    flow2 = jax.block_until_ready(
        soft_arg2d_flow_regression(x2, max_u=max_u, max_v=max_v, operation="argmax"))
    ref2 = _reference(x2, max_u=max_u, max_v=max_v, operation="argmax")
    assert flow2.shape == (B2, 2, H2, W2)
    assert jnp.allclose(flow2, ref2, atol=1e-5, rtol=1e-5), "mismatch vs reference (ragged)"

    print("KERNEL_OK")
</pallas_src>

<mosaic_0001>
module attributes {stable_mosaic.version = 11 : i64} {
  func.func @_softarg_kernel(%arg0: i32, %arg1: i32, %arg2: memref<1x49x256xf32, #tpu.memory_space<vmem>>, %arg3: memref<1x2x256xf32, #tpu.memory_space<vmem>>) attributes {dimension_semantics = [#tpu.dimension_semantics<parallel>, #tpu.dimension_semantics<parallel>], iteration_bounds = array<i64: 2, 1>, scalar_prefetch = 0 : i64, scratch_operands = 0 : i64, tpu.core_type = #tpu.core_type<tc>, window_params = [{transform_indices = @transform_0, window_bounds = array<i64: 1, 49, 256>}, {transform_indices = @transform_1, window_bounds = array<i64: 1, 2, 256>}]} {
    %c0 = arith.constant 0 : index
    %c0_0 = arith.constant 0 : index
    %c0_1 = arith.constant 0 : index
    %0 = vector.load %arg2[%c0, %c0_0, %c0_1] : memref<1x49x256xf32, #tpu.memory_space<vmem>>, vector<1x49x256xf32>
    %1 = vector.shape_cast %0 : vector<1x49x256xf32> to vector<49x256xf32>
    %cst = arith.constant dense<0xFF800000> : vector<256xf32>
    %2 = vector.multi_reduction <maximumf>, %1, %cst [0] : vector<49x256xf32> to vector<256xf32>
    %3 = vector.shape_cast %2 : vector<256xf32> to vector<1x256xf32>
    %4 = vector.broadcast %3 : vector<1x256xf32> to vector<49x256xf32>
    %5 = arith.subf %1, %4 : vector<49x256xf32>
    %6 = math.exp %5 : vector<49x256xf32>
    %7 = tpu.iota {dimensions = array<i32: 1>} : vector<8x49xi32>
    %8 = arith.sitofp %7 : vector<8x49xi32> to vector<8x49xf32>
    %9 = tpu.iota {dimensions = array<i32: 0>} : vector<8x49xi32>
    %cst_2 = arith.constant 5.000000e-01 : f32
    %10 = vector.broadcast %cst_2 : f32 to vector<8x49xf32>
    %11 = arith.addf %8, %10 : vector<8x49xf32>
    %cst_3 = arith.constant 0.142857149 : f32
    %12 = vector.broadcast %cst_3 : f32 to vector<8x49xf32>
    %13 = arith.mulf %11, %12 : vector<8x49xf32>
    %14 = math.floor %13 : vector<8x49xf32>
    %cst_4 = arith.constant 3.000000e+00 : f32
    %15 = vector.broadcast %cst_4 : f32 to vector<8x49xf32>
    %16 = arith.subf %14, %15 : vector<8x49xf32>
    %cst_5 = arith.constant 7.000000e+00 : f32
    %17 = vector.broadcast %cst_5 : f32 to vector<8x49xf32>
    %18 = arith.mulf %14, %17 : vector<8x49xf32>
    %19 = arith.subf %8, %18 : vector<8x49xf32>
    %cst_6 = arith.constant 3.000000e+00 : f32
    %20 = vector.broadcast %cst_6 : f32 to vector<8x49xf32>
    %21 = arith.subf %19, %20 : vector<8x49xf32>
    %c0_i32 = arith.constant 0 : i32
    %22 = vector.broadcast %c0_i32 : i32 to vector<8x49xi32>
    %23 = arith.cmpi eq, %9, %22 : vector<8x49xi32>
    %c1_i32 = arith.constant 1 : i32
    %24 = vector.broadcast %c1_i32 : i32 to vector<8x49xi32>
    %25 = arith.cmpi eq, %9, %24 : vector<8x49xi32>
    %c2_i32 = arith.constant 2 : i32
    %26 = vector.broadcast %c2_i32 : i32 to vector<8x49xi32>
    %27 = arith.cmpi eq, %9, %26 : vector<8x49xi32>
    %cst_7 = arith.constant 0.000000e+00 : f32
    %28 = vector.broadcast %cst_7 : f32 to vector<8x49xf32>
    %29 = arith.select %27, %21, %28 : vector<8x49xi1>, vector<8x49xf32>
    %30 = arith.select %25, %16, %29 : vector<8x49xi1>, vector<8x49xf32>
    %cst_8 = arith.constant 1.000000e+00 : f32
    %31 = vector.broadcast %cst_8 : f32 to vector<8x49xf32>
    %32 = arith.select %23, %31, %30 : vector<8x49xi1>, vector<8x49xf32>
    %cst_9 = arith.constant dense<0.000000e+00> : vector<8x256xf32>
    %33 = tpu.matmul %32, %6, %cst_9 {dimension_numbers = #tpu.dot_dimension_numbers<[1], [0], [0], [1], [0, 0, 1, 1], [], []>} : vector<8x49xf32>, vector<49x256xf32>, vector<8x256xf32> -> vector<8x256xf32>
    %34 = vector.extract_strided_slice %33 {offsets = [0, 0], sizes = [1, 256], strides = [1, 1]} : vector<8x256xf32> to vector<1x256xf32>
    %35 = tpu.reciprocal %34 : vector<1x256xf32> -> vector<1x256xf32>
    %36 = vector.extract_strided_slice %33 {offsets = [1, 0], sizes = [2, 256], strides = [1, 1]} : vector<8x256xf32> to vector<2x256xf32>
    %37 = vector.broadcast %35 : vector<1x256xf32> to vector<2x256xf32>
    %38 = arith.mulf %36, %37 : vector<2x256xf32>
    %c0_10 = arith.constant 0 : index
    %c0_11 = arith.constant 0 : index
    %c0_12 = arith.constant 0 : index
    %39 = vector.load %arg3[%c0_10, %c0_11, %c0_12] : memref<1x2x256xf32, #tpu.memory_space<vmem>>, vector<1x2x256xf32>
    %40 = vector.shape_cast %39 : vector<1x2x256xf32> to vector<2x256xf32>
    %41 = vector.shape_cast %38 : vector<2x256xf32> to vector<1x2x256xf32>
    tpu.vector_store %arg3[%c0_10, %c0_11, %c0_12], %41 {strides = array<i32>} : memref<1x2x256xf32, #tpu.memory_space<vmem>>, vector<1x2x256xf32>,
    return
  }
  func.func @transform_0(%arg0: i32, %arg1: i32) -> (i32, i32, i32) {
    %c0_i32 = arith.constant 0 : i32
    %c0_i32_0 = arith.constant 0 : i32
    return %arg0, %c0_i32, %arg1 : i32, i32, i32
  }
  func.func @transform_1(%arg0: i32, %arg1: i32) -> (i32, i32, i32) {
    %c0_i32 = arith.constant 0 : i32
    %c0_i32_0 = arith.constant 0 : i32
    return %arg0, %c0_i32, %arg1 : i32, i32, i32
  }
}

</mosaic_0001>

<llo_original>
// kernel: tpu_custom_call.1
$region0: #{tpu_custom_call.1}
  #allocation0 [shape = 'u32[]', space=smem, size = 0x4, offset = 0x4, fixed_abs, tag = 'smem constant byte address 0x4 - core index']
  #allocation1 [shape = 'u32[144,128]{1,0:T(1,128)}', space=vmem, size = 0x12000, scoped, tag = 'internal scratch']
  %s0 = inlined_call_operand.vmem [shape: f32[2,49,256], index: 0, kind: input, shape index: {}]
  %s1 = inlined_call_operand.hbm [shape: f32[2,2,256], index: 1, kind: output, shape index: {}]
  %s2 = sld [smem:[#allocation0]]
  $region37: #{tpu_custom_call.1} parent=0
    _
  %s4 = ssub.s32 1, %s2
  %s5 = scalar_select 0, %s4, %s2
  $region1: #{tpu_custom_call.1} parent=0
    #allocation2 [shape = 'u8[4096]{0}', space=vmem, size = 0x1000, scoped, tag = 'output window, operand 0']
    #allocation3 [shape = 's32[2]{0}', space=sflag, size = 0x8, scoped, tag = 'scoped memory for tpu_custom_call.1']
    %6 = vsyncpa [#allocation3], 0
    %s7 = scalar_lea.sflag [#allocation3], 1
    %8 = vsyncpa %s7, 0
    loop: start=0, step=1, limit=4
    $region2: #{tpu_custom_call.1} parent=1 // loop_pre_header
      _
    $region3: #{tpu_custom_call.1} parent=1 // loop_header
      %s10 = sphi 0, %s14
      %p11 = scmp.ge.s32.totalorder %s10, 4
      %s17 = sphi 0, %s29
      %s18 = sphi 0, %s25
      %s19 = sphi 0, %s17
      %s20 = sphi 0, %s18
      %s21 = sphi 0, %s19
      %s22 = sphi 0, %s20
      %s34 = sphi 0, %s36
      %s37 = sphi 0, %s34
      %s38 = sphi 0, %s37
      %s54 = sphi 0, %s38
      %s62 = sphi 0, %s64
      %s65 = sphi 0, %s62
      %s66 = sphi 0, %s65
      %s82 = sphi 0, %s66
    $region4: #{tpu_custom_call.1} parent=1 // loop_header_branch
      %13 = sbr.rel (%p11) target = $region8
    $region5: #{tpu_custom_call.1} parent=1 // loop_body
      %s15 = ssub.s32 %s10, 1
      %s16 = ssub.s32 %s10, 2
      %s23 = sadd.s32 1, %s18
      %p24 = scmp.ge.s32.totalorder %s23, 1
      %s25 = scalar_select %p24, 0, %s23
      %s26 = sadd.s32 1, %s17
      %s27 = scalar_select %p24, %s26, %s17
      %p28 = scmp.ge.s32.totalorder %s27, 2
      %s29 = scalar_select %p28, 0, %s27
      %s30 = ssub.s32 %s17, %s29
      %s31 = ssub.s32 %s18, %s25
      %s32 = sor.u32 %s30, %s31
      %p33 = scmp.eq.s32.totalorder %s32, 0
      %s35 = sadd.s32 %s34, 1
      %s36 = scalar_select %p33, %s34, %s35
      %p39 = pneg %p33
      %p40 = scmp.eq.s32.totalorder %s10, 1
      %p41 = por %p39, %p40
      %p42 = scmp.ne.s32.totalorder %s34, %s37
      %p43 = scmp.eq.s32.totalorder %s10, 0
      %p44 = por %p42, %p43
      %p45 = scmp.ne.s32.totalorder %s34, %s37
      %p46 = scmp.eq.s32.totalorder %s15, 1
      %p47 = por %p45, %p46
      %p48 = scmp.ne.s32.totalorder %s37, %s38
      %p49 = scmp.eq.s32.totalorder %s15, 0
      %p50 = por %p48, %p49
      %p51 = scmp.ne.s32.totalorder %s37, %s38
      %p52 = scmp.eq.s32.totalorder %s16, 1
      %p53 = por %p51, %p52
      %p55 = scmp.ne.s32.totalorder %s38, %s54
      %p56 = scmp.eq.s32.totalorder %s16, 0
      %p57 = por %p55, %p56
      %s58 = ssub.s32 %s17, %s29
      %s59 = ssub.s32 %s18, %s25
      %s60 = sor.u32 %s58, %s59
      %p61 = scmp.eq.s32.totalorder %s60, 0
      %s63 = sadd.s32 %s62, 1
      %s64 = scalar_select %p61, %s62, %s63
      %p67 = pneg %p61
      %p68 = scmp.eq.s32.totalorder %s10, 1
      %p69 = por %p67, %p68
      %p70 = scmp.ne.s32.totalorder %s62, %s65
      %p71 = scmp.eq.s32.totalorder %s10, 0
      %p72 = por %p70, %p71
      %p73 = scmp.ne.s32.totalorder %s62, %s65
      %p74 = scmp.eq.s32.totalorder %s15, 1
      %p75 = por %p73, %p74
      %p76 = scmp.ne.s32.totalorder %s65, %s66
      %p77 = scmp.eq.s32.totalorder %s15, 0
      %p78 = por %p76, %p77
      %p79 = scmp.ne.s32.totalorder %s65, %s66
      %p80 = scmp.eq.s32.totalorder %s16, 1
      %p81 = por %p79, %p80
      %p83 = scmp.ne.s32.totalorder %s66, %s82
      %p84 = scmp.eq.s32.totalorder %s16, 0
      %p85 = por %p83, %p84
      %p86 = scmp.le.s32.totalorder 1, %s10
      %p87 = scmp.lt.s32.totalorder %s10, 3
      %p88 = pnand %p86, %p87
      %p89 = pneg %p88
      // Predicated region
      $region9: #{tpu_custom_call.1} parent=5 // pred_check
        _
      $region10: #{tpu_custom_call.1} parent=5 // pred_check_branch
        %91 = sbr.rel (%p88) target = $region12
      $region11: #{tpu_custom_call.1} parent=5 // pred_region
        %s92 = ssub.s32 %s10, 1
      $region12: #{tpu_custom_call.1} parent=5 // pred_fallthru
        _
      %p93 = scmp.lt.s32.totalorder %s10, 2
      // Predicated region
      $region13: #{tpu_custom_call.1} parent=5 // pred_check
        %p94 = pneg %p93
      $region14: #{tpu_custom_call.1} parent=5 // pred_check_branch
        %96 = sbr.rel (%p94) target = $region16
      $region15: #{tpu_custom_call.1} parent=5 // pred_region
        // Predicated region
        $region17: #{tpu_custom_call.1} parent=15 // pred_check
          %p97 = pneg %p44
        $region18: #{tpu_custom_call.1} parent=15 // pred_check_branch
          %99 = sbr.rel (%p97) target = $region20
        $region19: #{tpu_custom_call.1} parent=15 // pred_region
          %s100 = smul.u32 2, %s18
          %p101 = scmp.lt.s32.totalorder %s17, 1
          %s102 = scalar_select %p101, %s17, 1
          %p103 = scmp.lt.s32.totalorder %s100, 1
          %s104 = scalar_select %p103, %s100, 1
          %s105 = smul.addr %s102, 14
          %s106 = sadd.s32 %s104, %s105
          %s107 = smul.addr %s106, 8
          %s108 = scalar_lea.vmem %s0, %s107
          %s109 = smul.u32 2, %s18
        $region20: #{tpu_custom_call.1} parent=15 // pred_fallthru
          _
      $region16: #{tpu_custom_call.1} parent=5 // pred_fallthru
        _
      %p110 = scmp.le.s32.totalorder 1, %s10
      %p111 = scmp.lt.s32.totalorder %s10, 3
      %p112 = pnand %p110, %p111
      %p113 = pneg %p112
      // Predicated region
      $region21: #{tpu_custom_call.1} parent=5 // pred_check
        _
      $region22: #{tpu_custom_call.1} parent=5 // pred_check_branch
        %115 = sbr.rel (%p112) target = $region24
      $region23: #{tpu_custom_call.1} parent=5 // pred_region
        %s116 = ssub.s32 %s10, 1
        %s117 = smul.u32 2, %s20
        %p118 = scmp.lt.s32.totalorder %s19, 1
        %s119 = scalar_select %p118, %s19, 1
        %p120 = scmp.lt.s32.totalorder %s117, 1
        %s121 = scalar_select %p120, %s117, 1
        %s122 = smul.addr %s119, 14
        %s123 = sadd.s32 %s121, %s122
        %s124 = smul.addr %s123, 8
        %s125 = scalar_lea.vmem %s0, %s124
        %p126 = pneg %p50
        %p127 = pneg %p47
        %p128 = pneg %p78
        %p129 = pneg %p75
        %s130 = sand.u32 %s65, 1
        %s131 = scalar_lea.sflag [#allocation3], %s130
        %s132 = sand.u32 %s65, 1
        %s133 = smul.addr %s132, 4
        %s134 = scalar_lea.vmem [#allocation2], %s133
        %s135 = smul.u32 2, %s20
        %p136 = scmp.lt.s32.totalorder %s19, 1
        %s137 = scalar_select %p136, %s19, 1
        %p138 = scmp.lt.s32.totalorder %s135, 1
        %s139 = scalar_select %p138, %s135, 1
        %s140 = smul.addr %s137, 14
        %s141 = sadd.s32 %s139, %s140
        %s142 = smul.addr %s141, 8
        %s143 = scalar_lea.vmem %s0, %s142
        %s144 = smul.u32 2, %s20
        %s145 = smul.u32 2, %s20
        %v146 = vld [vmem:[%s143] sm:$0xff]
        %v147 = vld [vmem:[%s143 + $0x8] sm:$0xff]
        %v148 = vld [vmem:[%s143 + $0x10] sm:$0xff]
        %v149 = vld [vmem:[%s143 + $0x18] sm:$0xff]
        %v150 = vld [vmem:[%s143 + $0x20] sm:$0xff]
        %v151 = vld [vmem:[%s143 + $0x28] sm:$0xff]
        %v152 = vld [vmem:[%s143 + $0x30] sm:$0xff]
        %v153 = vld [vmem:[%s143 + $0x38] sm:$0xff]
        %v154 = vld [vmem:[%s143 + $0x40] sm:$0xff]
        %v155 = vld [vmem:[%s143 + $0x48] sm:$0xff]
        %v156 = vld [vmem:[%s143 + $0x50] sm:$0xff]
        %v157 = vld [vmem:[%s143 + $0x58] sm:$0xff]
        %v158 = vld [vmem:[%s143 + $0x60] sm:$0x1]
        %v159 = vld [vmem:[%s143 + $0x68] sm:$0x1]
        %v160 = vmax.f32 %v146, %v150
        %v161 = vmax.f32 %v148, %v152
        %v162 = vmax.f32 %v160, %v154
        %v163 = vmax.f32 %v161, %v156
        %vm164 = vcmask 1040384
        %v165 = vsel %vm164, %v158, -inf
        %v166 = vmax.f32 %v162, %v165
        %v167 = vmax.f32 %v166, %v163
        %v168 = vrot.slane %v167, 4
        %v169 = vmax.f32 %v167, %v168
        %v170 = vrot.slane %v169, 2
        %v171 = vmax.f32 %v169, %v170
        %v172 = vrot.slane %v171, 1
        %v173 = vmax.f32 %v171, %v172
        %v174 = vmax.f32 %v147, %v151
        %v175 = vmax.f32 %v149, %v153
        %v176 = vmax.f32 %v174, %v155
        %v177 = vmax.f32 %v175, %v157
        %v178 = vsel %vm164, %v159, -inf
        %v179 = vmax.f32 %v176, %v178
        %v180 = vmax.f32 %v179, %v177
        %v181 = vrot.slane %v180, 4
        %v182 = vmax.f32 %v180, %v181
        %v183 = vrot.slane %v182, 2
        %v184 = vmax.f32 %v182, %v183
        %v185 = vrot.slane %v184, 1
        %v186 = vmax.f32 %v184, %v185
        %v187 = vsub.f32 %v146, %v173
        %v188 = vsub.f32 %v147, %v186
        %v189 = vsub.f32 %v148, %v173
        %v190 = vsub.f32 %v149, %v186
        %v191 = vsub.f32 %v150, %v173
        %v192 = vsub.f32 %v151, %v186
        %v193 = vsub.f32 %v152, %v173
        %v194 = vsub.f32 %v153, %v186
        %v195 = vsub.f32 %v154, %v173
        %v196 = vsub.f32 %v155, %v186
        %v197 = vsub.f32 %v156, %v173
        %v198 = vsub.f32 %v157, %v186
        %v199 = vsub.f32 %v158, %v173
        %v200 = vsub.f32 %v159, %v186
        %v201 = vmul.f32 %v187, 1.442695
        %v202 = vpow.pop %v201
        %v203 = vmul.f32 %v188, 1.442695
        %v204 = vpow.pop %v203
        %v205 = vmul.f32 %v189, 1.442695
        %v206 = vpow.pop %v205
        %v207 = vmul.f32 %v190, 1.442695
        %v208 = vpow.pop %v207
        %v209 = vmul.f32 %v191, 1.442695
        %v210 = vpow.pop %v209
        %v211 = vmul.f32 %v192, 1.442695
        %v212 = vpow.pop %v211
        %v213 = vmul.f32 %v193, 1.442695
        %v214 = vpow.pop %v213
        %v215 = vmul.f32 %v194, 1.442695
        %v216 = vpow.pop %v215
        %v217 = vmul.f32 %v195, 1.442695
        %v218 = vpow.pop %v217
        %v219 = vmul.f32 %v196, 1.442695
        %v220 = vpow.pop %v219
        %v221 = vmul.f32 %v197, 1.442695
        %v222 = vpow.pop %v221
        %v223 = vmul.f32 %v198, 1.442695
        %v224 = vpow.pop %v223
        %v225 = vmul.f32 %v199, 1.442695
        %v226 = vpow.pop %v225
        %v227 = vmul.f32 %v200, 1.442695
        %v228 = vpow.pop %v227
        %v229 = vlaneseq
        %v230 = vand.u32 %v229, 127
        %v231 = vcvt.s32.f32 %v230
        %v232 = vlaneseq
        %v233 = vshrl.u32 %v232, 7
        %v234 = vadd.f32 %v231, 0.5
        %v235 = vmul.f32 %v234, 0.14285715
        %v236 = vfloor.f32 %v235
        %v237 = vsub.f32 %v236, 3.0
        %v238 = vmul.f32 %v236, 7.0
        %v239 = vsub.f32 %v231, %v238
        %v240 = vsub.f32 %v239, 3.0
        %vm241 = vcmp.eq.s32.totalorder %v233, 0
        %vm242 = vcmp.eq.s32.totalorder %v233, 1
        %vm243 = vcmp.eq.s32.totalorder %v233, 2
        %v244 = vsel %vm243, %v240, 0.0
        %v245 = vsel %vm242, %v237, %v244
        %v246 = vsel %vm241, 1.0, %v245
        %vm247 = vcmask 400384
        %v249 = vsel %vm247, %v246, 0
        %v252 = vsel %vm164, %v226, 0
        %v255 = vsel %vm164, %v228, 0
        %257 = vmatprep.subr.mxu0 %v204
        %258 = vmatpush1.msra.mxu0 %v202
        %259 = vmatprep.subr.mxu0 %v208
        %260 = vmatpush1.msra.mxu0 %v206
        %261 = vmatprep.subr.mxu0 %v212
        %262 = vmatpush1.msra.mxu0 %v210
        %263 = vmatprep.subr.mxu0 %v216
        %264 = vmatpush1.msra.mxu0 %v214
        %265 = vmatprep.subr.mxu0 %v220
        %266 = vmatpush1.msra.mxu0 %v218
        %267 = vmatprep.subr.mxu0 %v224
        %268 = vmatpush1.msra.mxu0 %v222
        %269 = vmatprep.subr.mxu0 %v255
        %270 = vmatpush1.msra.mxu0 %v252
        %271 = vmatprep.subr.mxu0 0.0
        %272 = vmatpush1.msra.mxu0 0.0
        %273 = vmatprep.subr.mxu0 0.0
        %274 = vmatpush1.msra.mxu0 0.0
        %275 = vmatprep.subr.mxu0 0.0
        %276 = vmatpush1.msra.mxu0 0.0
        %277 = vmatprep.subr.mxu0 0.0
        %278 = vmatpush1.msra.mxu0 0.0
        %279 = vmatprep.subr.mxu0 0.0
        %280 = vmatpush1.msra.mxu0 0.0
        %281 = vmatprep.subr.mxu0 0.0
        %282 = vmatpush1.msra.mxu0 0.0
        %283 = vmatprep.subr.mxu0 0.0
        %284 = vmatpush1.msra.mxu0 0.0
        %285 = vmatprep.subr.mxu0 0.0
        %286 = vmatpush1.msra.mxu0 0.0
        %287 = vmatprep.subr.mxu0 0.0
        %288 = vmatpush1.msra.mxu0 0.0
        %289 = vmatprep.subr.mxu0 0.0
        %290 = vmatpush1.msra.mxu0 0.0
        %291 = vmatprep.subr.mxu0 0.0
        %292 = vmatpush1.msra.mxu0 0.0
        %293 = vmatprep.subr.mxu0 0.0
        %294 = vmatpush1.msra.mxu0 0.0
        %295 = vmatprep.subr.mxu0 0.0
        %296 = vmatpush1.msra.mxu0 0.0
        %297 = vmatprep.subr.mxu0 0.0
        %298 = vmatpush1.msra.mxu0 0.0
        %299 = vmatprep.subr.mxu0 0.0
        %300 = vmatpush1.msra.mxu0 0.0
        %301 = vmatprep.subr.mxu0 0.0
        %302 = vmatpush1.msra.mxu0 0.0
        %303 = vmatprep.subr.mxu0 0.0
        %304 = vmatpush1.msra.mxu0 0.0
        %305 = vmatprep.subr.mxu0 0.0
        %306 = vmatpush1.msra.mxu0 0.0
        %307 = vmatprep.subr.mxu0 0.0
        %308 = vmatpush1.msra.mxu0 0.0
        %309 = vmatprep.subr.mxu0 0.0
        %310 = vmatpush1.msra.mxu0 0.0
        %311 = vmatprep.subr.mxu0 0.0
        %312 = vmatpush1.msra.mxu0 0.0
        %313 = vmatprep.subr.mxu0 0.0
        %314 = vmatpush1.msra.mxu0 0.0
        %315 = vmatprep.subr.mxu0 0.0
        %316 = vmatpush1.msra.mxu0 0.0
        %317 = vmatprep.subr.mxu0 0.0
        %318 = vmatpush1.msra.mxu0 0.0
        %319 = vmatprep.subr.mxu0 0.0
        %320 = vmatpush1.msra.mxu0 0.0
        %321 = vmatprep.mubr.f32.mxu0 0.0
        %322 = vmatmul.mubr.f32.gmra.mrb[0].mxu0 %v249
        %v323 = vpop.f32.mrb[0].mxu0
        %v324 = vadd.f32 0.0, %v323
        %v325 = vpop.f32.mrb[0].mxu0
        %v326 = vadd.f32 0.0, %v325
        %327 = vdwg.mxu0
        %v328 = vrcp.pop %v324
        %v329 = vrcp.pop %v326
        %v330 = vlaneseq
        %v331 = vshrl.u32 %v330, 7
        %v332 = vsub.s32 0, %v331
        %v333 = vrot.slane %v328, %v332
        %v334 = vlaneseq
        %v335 = vshrl.u32 %v334, 7
        %v336 = vsub.s32 0, %v335
        %v337 = vrot.slane %v329, %v336
        %v338 = vmul.f32 %v324, %v333
        %v339 = vmul.f32 %v326, %v337
        %v342 = vcombine.low %v338, %v339
        %v344 = vunpack.c.l.s4 1983009808
        %v345 = vunpack.c.0.s8 %v344
        %v346 = vlaneseq
        %v347 = vshrl.u32 %v346, 7
        %v348 = vsub.s32 %v345, %v347
        %v349 = vrot.slane %v342, %v348
        %v350 = vcombine.high %v349, %v349
        %vm351 = vcmask 1042434
        %vm352 = vmor %vm164, %vm351
        %vm353 = vcmask 1044484
        %vm354 = vmor %vm352, %vm353
        %vm355 = vcmask 1046534
        %vm356 = vmor %vm354, %vm355
        %v357 = vrot.slane %v349, 7
        %v358 = vrot.slane %v357, 2
        %v359 = vrot.slane %v350, 7
        %v360 = vsel %vm356, %v358, %v359
        %362 = vst [vmem:[%s134] sm:$0xf] %v360
        %s363 = sand.u32 %s65, 1
        %s364 = scalar_lea.sflag [#allocation3], %s363
        %s365 = sand.u32 %s65, 1
        %s366 = smul.addr %s365, 4
        %s367 = scalar_lea.vmem [#allocation2], %s366
        // Predicated region
        $region25: #{tpu_custom_call.1} parent=23 // pred_check
          %p368 = pneg %p75
        $region26: #{tpu_custom_call.1} parent=23 // pred_check_branch
          %370 = sbr.rel (%p368) target = $region28
        $region27: #{tpu_custom_call.1} parent=23 // pred_region
          %s371 = smul.u32 2, %s20
          %s373 = ssub.s32 64, 64
          %374 = vsyncadd %s364, %s373
          %s375 = smul.addr %s19, 2
          %s376 = sadd.s32 %s371, %s375
          %s377 = smul.addr %s376, 32
          %s378 = scalar_lea.hbm %s1, %s377
          %s380 = sshll.u32 %s367, 4
          %s381 = int_to_ptr.vmem [resolvable:$true] %s380
          %383 = dma.vmem_to_hbm [thread:$0]  %s381, 64, %s378, %s364
        $region28: #{tpu_custom_call.1} parent=23 // pred_fallthru
          _
      $region24: #{tpu_custom_call.1} parent=5 // pred_fallthru
        _
      %p384 = scmp.le.s32.totalorder 2, %s10
      // Predicated region
      $region29: #{tpu_custom_call.1} parent=5 // pred_check
        %p385 = pneg %p384
      $region30: #{tpu_custom_call.1} parent=5 // pred_check_branch
        %387 = sbr.rel (%p385) target = $region32
      $region31: #{tpu_custom_call.1} parent=5 // pred_region
        %s388 = ssub.s32 %s10, 2
        // Predicated region
        $region33: #{tpu_custom_call.1} parent=31 // pred_check
          %p389 = pneg %p81
        $region34: #{tpu_custom_call.1} parent=31 // pred_check_branch
          %391 = sbr.rel (%p389) target = $region36
        $region35: #{tpu_custom_call.1} parent=31 // pred_region
          %s392 = sand.u32 %s66, 1
          %s393 = scalar_lea.sflag [#allocation3], %s392
          %s394 = sand.u32 %s66, 1
          %s395 = smul.addr %s394, 4
          %s396 = scalar_lea.vmem [#allocation2], %s395
          %397 = dma.done %s393, 64
        $region36: #{tpu_custom_call.1} parent=31 // pred_fallthru
          _
      $region32: #{tpu_custom_call.1} parent=5 // pred_fallthru
        _
    $region6: #{tpu_custom_call.1} parent=1 // loop_footer
      %s14 = sadd.s32 1, %s10
    $region7: #{tpu_custom_call.1} parent=1 // loop_footer_branch
      %9 = sbr.rel target = $region3
    $region8: #{tpu_custom_call.1} parent=1 // loop_exit
      _
    %398 = vsyncpa [#allocation3], 1
    %s399 = scalar_lea.sflag [#allocation3], 1
    %400 = vsyncpa %s399, 1

</llo_original>
